<compile_context>
chip_gen: v7x
topology: tpu7x:2x2x1
jax: 0.10.0
libtpu: 0.0.40
codegen_flags: <defaults>
</compile_context>

<pallas_src>
import functools

import jax
import jax.numpy as jnp
import numpy as np
from jax.experimental import pallas as pl
from jax.experimental.pallas import tpu as pltpu

RRELU_EVAL_SLOPE = 11.0 / 48.0  # (1/8 + 1/3) / 2, PyTorch RReLU defaults
BN_EPS = 1e-5
LANES = 128
SUBLANES = 8


def _round_up(x, m):
    return (x + m - 1) // m * m


# --------------------------------------------------------------------------- #
# Kernel (feature-major)
# --------------------------------------------------------------------------- #
def _mlp_kernel(n_hidden, x_ref, *refs):
    """Fused MLP, feature-major.

    x_ref : [in_dim, tile_b]  compute dtype (bf16), batch on the lane axis.
    refs  : ([w, b] * n_hidden, w_out, b_out, out_ref)
            w   : [out_feat, in_feat] bf16 (BatchNorm folded in)
            b   : [out_feat, 1]       f32
            out : [out_pad, tile_b]   f32
    Matmuls run on the MXU with f32 accumulation; elementwise epilogue is f32.
    """
    out_ref = refs[-1]
    slope = jnp.float32(RRELU_EVAL_SLOPE)
    cdtype = x_ref.dtype

    h = x_ref[...]                                            # [in, tile_b]
    idx = 0
    for _ in range(n_hidden):
        w_ref, b_ref = refs[idx], refs[idx + 1]
        idx += 2
        a = jnp.dot(w_ref[...], h, preferred_element_type=jnp.float32)
        a = a + b_ref[...]                      # BN already folded into w/b
        a = jnp.where(a >= 0.0, a, slope * a)   # RReLU (eval) == leaky ReLU
        h = a.astype(cdtype)                    # back to compute dtype for MXU

    wo_ref, bo_ref = refs[idx], refs[idx + 1]
    o = jnp.dot(wo_ref[...], h, preferred_element_type=jnp.float32) + bo_ref[...]
    # Exact sigmoid: exp lands on the EUP; the divide is negligible on the tiny
    # (out_pad, tile_b) output and keeps probabilities well calibrated.
    out_ref[...] = 1.0 / (1.0 + jnp.exp(-o))


# --------------------------------------------------------------------------- #
# Parameter preparation (call ONCE at load time, outside jit)
# --------------------------------------------------------------------------- #
def prepare_params(layers, w_out, b_out, compute_dtype=jnp.bfloat16):
    """Fold BatchNorm into each Linear, transpose everything to feature-major
    ([out_feat, in_feat] weights, [out_feat, 1] biases), pad the output layer
    to a multiple of 8 sublanes, and cast matmul operands to compute_dtype."""
    params = []
    for layer in layers:
        w = jnp.asarray(layer["w"], jnp.float32)          # [in, out]
        b = jnp.asarray(layer["b"], jnp.float32)          # [out]
        gamma = jnp.asarray(layer["gamma"], jnp.float32)
        beta = jnp.asarray(layer["beta"], jnp.float32)
        mean = jnp.asarray(layer["running_mean"], jnp.float32)
        var = jnp.asarray(layer["running_var"], jnp.float32)

        inv_std = 1.0 / jnp.sqrt(var + BN_EPS)
        scale = gamma * inv_std                            # per output feature
        shift = beta - mean * scale

        w_fm = (w.T * scale[:, None]).astype(compute_dtype)        # [out, in]
        b_fm = (b * scale + shift)[:, None].astype(jnp.float32)    # [out, 1]
        params += [w_fm, b_fm]

    w_out = jnp.asarray(w_out, jnp.float32)               # [in, out]
    b_out = jnp.asarray(b_out, jnp.float32)               # [out]
    out_dim = int(w_out.shape[1])
    out_pad = _round_up(out_dim, SUBLANES)                # sublane pad only
    wo = jnp.zeros((out_pad, w_out.shape[0]), jnp.float32)
    wo = wo.at[:out_dim, :].set(w_out.T)
    bo = jnp.zeros((out_pad, 1), jnp.float32)
    bo = bo.at[:out_dim, 0].set(b_out)
    params += [wo.astype(compute_dtype), bo]

    return tuple(params), out_dim, out_pad


# --------------------------------------------------------------------------- #
# Batch tile selection
# --------------------------------------------------------------------------- #
def _choose_tile_b(n, target_tile=2048, min_grid=4):
    """Pick a lane-aligned (multiple-of-128) batch tile.

    - never pads a small batch past its own lane-rounded size,
    - aims for >= min_grid grid steps (v7x megacore occupancy) when possible,
    - caps the tile at target_tile (x/out blocks stay < 1 MB of VMEM)."""
    n_lane = _round_up(max(n, 1), LANES)
    steps_cap = max(LANES, (n_lane // min_grid) // LANES * LANES)
    tile_b = max(LANES, min(target_tile, n_lane, steps_cap))
    n_pad = _round_up(n_lane, tile_b)
    return tile_b, n_pad


# --------------------------------------------------------------------------- #
# Forward wrapper (jit this with the prepared params)
# --------------------------------------------------------------------------- #
def dnn_classifier_forward(x, params, *, out_dim, target_tile=2048, min_grid=4):
    """x: [1, N, inputDim] or [N, inputDim]; params from prepare_params.
    Returns [N, out_dim] float32 probabilities."""
    if x.ndim == 3:
        x = jnp.squeeze(x, axis=0)               # input.squeeze(0)
    n, in_dim = x.shape
    n_hidden = len(params) // 2 - 1
    cdtype = params[0].dtype
    out_pad = params[-1].shape[0]

    tile_b, n_pad = _choose_tile_b(n, target_tile, min_grid)

    # Feature-major: batch on the 128-lane axis, features on sublanes.
    x_t = x.astype(cdtype).T                     # [in_dim, n]
    if n_pad != n:
        x_t = jnp.pad(x_t, ((0, 0), (0, n_pad - n)))

    grid = (n_pad // tile_b,)

    # x / out are tiled along the (lane) batch axis; all weights & biases keep
    # block index (0, 0) so they are DMA'd once and stay VMEM-resident.
    in_specs = [pl.BlockSpec((in_dim, tile_b), lambda i: (0, i))]
    for p in params:
        in_specs.append(pl.BlockSpec(p.shape, lambda i: (0, 0)))
    out_specs = pl.BlockSpec((out_pad, tile_b), lambda i: (0, i))

    kernel = functools.partial(_mlp_kernel, n_hidden)
    out = pl.pallas_call(
        kernel,
        out_shape=jax.ShapeDtypeStruct((out_pad, n_pad), jnp.float32),
        grid=grid,
        in_specs=in_specs,
        out_specs=out_specs,
        compiler_params=pltpu.CompilerParams(
            # Batch axis is independent -> megacore-shardable on v7x.
            dimension_semantics=("parallel",)),
    )(x_t, *params)

    # Drop sublane padding and padded batch columns; return [N, out_dim].
    return out[:out_dim, :n].T


# --------------------------------------------------------------------------- #
# References for correctness checks
# --------------------------------------------------------------------------- #
def _reference_eval_f32(x, layers, w_out, b_out):
    """Pure-JAX eval-mode reference, full f32."""
    if x.ndim == 3:
        x = jnp.squeeze(x, axis=0)
    h = x.astype(jnp.float32)
    for layer in layers:
        h = h @ layer["w"] + layer["b"]
        inv_std = 1.0 / jnp.sqrt(layer["running_var"] + BN_EPS)
        h = (h - layer["running_mean"]) * inv_std * layer["gamma"] + layer["beta"]
        h = jnp.where(h >= 0.0, h, RRELU_EVAL_SLOPE * h)
    o = h @ w_out + b_out
    return jax.nn.sigmoid(o)


def _reference_matching(x, params, out_dim, n_hidden):
    """Reference using the same folded/feature-major/bf16 params as the kernel."""
    if x.ndim == 3:
        x = jnp.squeeze(x, axis=0)
    cdtype = params[0].dtype
    h = x.astype(cdtype).T
    idx = 0
    for _ in range(n_hidden):
        w, b = params[idx], params[idx + 1]
        idx += 2
        a = jnp.dot(w, h, preferred_element_type=jnp.float32) + b
        a = jnp.where(a >= 0.0, a, RRELU_EVAL_SLOPE * a)
        h = a.astype(cdtype)
    wo, bo = params[idx], params[idx + 1]
    o = jnp.dot(wo, h, preferred_element_type=jnp.float32) + bo
    p = 1.0 / (1.0 + jnp.exp(-o))
    return p[:out_dim, :].T


# --------------------------------------------------------------------------- #
# Deterministic synthetic parameters (PyTorch-like uniform init)
# --------------------------------------------------------------------------- #
def _init_params(key, input_dim, hidden_dims, output_dim):
    layers = []
    dims = [input_dim] + list(hidden_dims)
    for i in range(len(hidden_dims)):
        fan_in, fan_out = dims[i], dims[i + 1]
        key, kw, kb, kg, kbe, km, kv = jax.random.split(key, 7)
        bound = 1.0 / np.sqrt(fan_in)
        layers.append(dict(
            w=jax.random.uniform(kw, (fan_in, fan_out), jnp.float32, -bound, bound),
            b=jax.random.uniform(kb, (fan_out,), jnp.float32, -bound, bound),
            gamma=jax.random.uniform(kg, (fan_out,), jnp.float32, 0.5, 1.5),
            beta=jax.random.uniform(kbe, (fan_out,), jnp.float32, -0.5, 0.5),
            running_mean=jax.random.uniform(km, (fan_out,), jnp.float32, -0.5, 0.5),
            running_var=jax.random.uniform(kv, (fan_out,), jnp.float32, 0.5, 1.5),
        ))
    key, kw, kb = jax.random.split(key, 3)
    bound = 1.0 / np.sqrt(hidden_dims[-1])
    w_out = jax.random.uniform(kw, (hidden_dims[-1], output_dim), jnp.float32,
                               -bound, bound)
    b_out = jax.random.uniform(kb, (output_dim,), jnp.float32, -bound, bound)
    return layers, w_out, b_out


if __name__ == "__main__":
    # params = {'inputDim': 32, 'hiddenDim': [64, 32], 'outputDim': 8, ...}
    input_dim, hidden_dims, output_dim = 32, [64, 32], 8
    batch = 16

    key = jax.random.PRNGKey(0)
    key, kx = jax.random.split(key)
    x = jax.random.normal(kx, (1, batch, input_dim), jnp.float32)  # squeezed -> (16, 32)

    layers, w_out, b_out = _init_params(key, input_dim, hidden_dims, output_dim)

    # Fold/transpose/pad/cast ONCE at load time; the jitted forward only sees
    # the prepared arrays (no per-call re-folding).
    params, out_dim, _ = prepare_params(layers, w_out, b_out)

    forward = jax.jit(functools.partial(dnn_classifier_forward, out_dim=out_dim))
    out = jax.block_until_ready(forward(x, params))
    assert out.shape == (batch, output_dim)

    # Tight check against a reference with identical (folded, bf16-matmul) math.
    ref_match = _reference_matching(x, params, out_dim, len(hidden_dims))
    np.testing.assert_allclose(np.asarray(out), np.asarray(ref_match),
                               rtol=5e-3, atol=5e-3)
    # Looser sanity check against the full-f32 eval-mode reference.
    ref_f32 = _reference_eval_f32(x, layers, w_out, b_out)
    np.testing.assert_allclose(np.asarray(out), np.asarray(ref_f32),
                               rtol=3e-2, atol=3e-2)

    print("KERNEL_OK")
</pallas_src>

<mosaic_0001>
module attributes {stable_mosaic.version = 11 : i64} {
  func.func @_mlp_kernel(%arg0: i32, %arg1: memref<32x128xbf16, #tpu.memory_space<vmem>>, %arg2: memref<64x32xbf16, #tpu.memory_space<vmem>>, %arg3: memref<64x1xf32, #tpu.memory_space<vmem>>, %arg4: memref<32x64xbf16, #tpu.memory_space<vmem>>, %arg5: memref<32x1xf32, #tpu.memory_space<vmem>>, %arg6: memref<8x32xbf16, #tpu.memory_space<vmem>>, %arg7: memref<8x1xf32, #tpu.memory_space<vmem>>, %arg8: memref<8x128xf32, #tpu.memory_space<vmem>>) attributes {dimension_semantics = [#tpu.dimension_semantics<parallel>], iteration_bounds = array<i64: 1>, scalar_prefetch = 0 : i64, scratch_operands = 0 : i64, tpu.core_type = #tpu.core_type<tc>, window_params = [{transform_indices = @transform_0, window_bounds = array<i64: 32, 128>}, {pipeline_mode = #tpu.pipeline_mode<synchronous>, transform_indices = @transform_1, window_bounds = array<i64: 64, 32>}, {pipeline_mode = #tpu.pipeline_mode<synchronous>, transform_indices = @transform_2, window_bounds = array<i64: 64, 1>}, {pipeline_mode = #tpu.pipeline_mode<synchronous>, transform_indices = @transform_3, window_bounds = array<i64: 32, 64>}, {pipeline_mode = #tpu.pipeline_mode<synchronous>, transform_indices = @transform_4, window_bounds = array<i64: 32, 1>}, {pipeline_mode = #tpu.pipeline_mode<synchronous>, transform_indices = @transform_5, window_bounds = array<i64: 8, 32>}, {pipeline_mode = #tpu.pipeline_mode<synchronous>, transform_indices = @transform_6, window_bounds = array<i64: 8, 1>}, {transform_indices = @transform_7, window_bounds = array<i64: 8, 128>}]} {
    %c0 = arith.constant 0 : index
    %c0_0 = arith.constant 0 : index
    %0 = vector.load %arg1[%c0, %c0_0] : memref<32x128xbf16, #tpu.memory_space<vmem>>, vector<32x128xbf16>
    %c0_1 = arith.constant 0 : index
    %c0_2 = arith.constant 0 : index
    %1 = vector.load %arg2[%c0_1, %c0_2] : memref<64x32xbf16, #tpu.memory_space<vmem>>, vector<64x32xbf16>
    %cst = arith.constant dense<0.000000e+00> : vector<64x128xf32>
    %2 = tpu.matmul %1, %0, %cst {dimension_numbers = #tpu.dot_dimension_numbers<[1], [0], [0], [1], [0, 0, 1, 1], [], []>} : vector<64x32xbf16>, vector<32x128xbf16>, vector<64x128xf32> -> vector<64x128xf32>
    %c0_3 = arith.constant 0 : index
    %c0_4 = arith.constant 0 : index
    %3 = vector.load %arg3[%c0_3, %c0_4] : memref<64x1xf32, #tpu.memory_space<vmem>>, vector<64x1xf32>
    %4 = vector.broadcast %3 : vector<64x1xf32> to vector<64x128xf32>
    %5 = arith.addf %2, %4 : vector<64x128xf32>
    %cst_5 = arith.constant 0.000000e+00 : f32
    %6 = vector.broadcast %cst_5 : f32 to vector<64x128xf32>
    %7 = arith.cmpf oge, %5, %6 : vector<64x128xf32>
    %cst_6 = arith.constant 0.229166672 : f32
    %8 = vector.broadcast %cst_6 : f32 to vector<64x128xf32>
    %9 = arith.mulf %8, %5 : vector<64x128xf32>
    %10 = arith.select %7, %5, %9 : vector<64x128xi1>, vector<64x128xf32>
    %11 = arith.truncf %10 : vector<64x128xf32> to vector<64x128xbf16>
    %c0_7 = arith.constant 0 : index
    %c0_8 = arith.constant 0 : index
    %12 = vector.load %arg4[%c0_7, %c0_8] : memref<32x64xbf16, #tpu.memory_space<vmem>>, vector<32x64xbf16>
    %cst_9 = arith.constant dense<0.000000e+00> : vector<32x128xf32>
    %13 = tpu.matmul %12, %11, %cst_9 {dimension_numbers = #tpu.dot_dimension_numbers<[1], [0], [0], [1], [0, 0, 1, 1], [], []>} : vector<32x64xbf16>, vector<64x128xbf16>, vector<32x128xf32> -> vector<32x128xf32>
    %c0_10 = arith.constant 0 : index
    %c0_11 = arith.constant 0 : index
    %14 = vector.load %arg5[%c0_10, %c0_11] : memref<32x1xf32, #tpu.memory_space<vmem>>, vector<32x1xf32>
    %15 = vector.broadcast %14 : vector<32x1xf32> to vector<32x128xf32>
    %16 = arith.addf %13, %15 : vector<32x128xf32>
    %cst_12 = arith.constant 0.000000e+00 : f32
    %17 = vector.broadcast %cst_12 : f32 to vector<32x128xf32>
    %18 = arith.cmpf oge, %16, %17 : vector<32x128xf32>
    %cst_13 = arith.constant 0.229166672 : f32
    %19 = vector.broadcast %cst_13 : f32 to vector<32x128xf32>
    %20 = arith.mulf %19, %16 : vector<32x128xf32>
    %21 = arith.select %18, %16, %20 : vector<32x128xi1>, vector<32x128xf32>
    %22 = arith.truncf %21 : vector<32x128xf32> to vector<32x128xbf16>
    %c0_14 = arith.constant 0 : index
    %c0_15 = arith.constant 0 : index
    %23 = vector.load %arg6[%c0_14, %c0_15] : memref<8x32xbf16, #tpu.memory_space<vmem>>, vector<8x32xbf16>
    %cst_16 = arith.constant dense<0.000000e+00> : vector<8x128xf32>
    %24 = tpu.matmul %23, %22, %cst_16 {dimension_numbers = #tpu.dot_dimension_numbers<[1], [0], [0], [1], [0, 0, 1, 1], [], []>} : vector<8x32xbf16>, vector<32x128xbf16>, vector<8x128xf32> -> vector<8x128xf32>
    %c0_17 = arith.constant 0 : index
    %c0_18 = arith.constant 0 : index
    %25 = vector.load %arg7[%c0_17, %c0_18] : memref<8x1xf32, #tpu.memory_space<vmem>>, vector<8x1xf32>
    %26 = vector.broadcast %25 : vector<8x1xf32> to vector<8x128xf32>
    %27 = arith.addf %24, %26 : vector<8x128xf32>
    %cst_19 = arith.constant 0.000000e+00 : f32
    %28 = vector.broadcast %cst_19 : f32 to vector<8x128xf32>
    %29 = arith.subf %28, %27 : vector<8x128xf32>
    %30 = math.exp %29 : vector<8x128xf32>
    %cst_20 = arith.constant 1.000000e+00 : f32
    %31 = vector.broadcast %cst_20 : f32 to vector<8x128xf32>
    %32 = arith.addf %31, %30 : vector<8x128xf32>
    %cst_21 = arith.constant 1.000000e+00 : f32
    %33 = vector.broadcast %cst_21 : f32 to vector<8x128xf32>
    %34 = arith.divf %33, %32 : vector<8x128xf32>
    %c0_22 = arith.constant 0 : index
    %c0_23 = arith.constant 0 : index
    %35 = vector.load %arg8[%c0_22, %c0_23] : memref<8x128xf32, #tpu.memory_space<vmem>>, vector<8x128xf32>
    tpu.vector_store %arg8[%c0_22, %c0_23], %34 {strides = array<i32>} : memref<8x128xf32, #tpu.memory_space<vmem>>, vector<8x128xf32>,
    return
  }
  func.func @transform_0(%arg0: i32) -> (i32, i32) {
    %c0_i32 = arith.constant 0 : i32
    %c0_i32_0 = arith.constant 0 : i32
    return %c0_i32, %arg0 : i32, i32
  }
  func.func @transform_1(%arg0: i32) -> (i32, i32) {
    %c0_i32 = arith.constant 0 : i32
    %c0_i32_0 = arith.constant 0 : i32
    %c0_i32_1 = arith.constant 0 : i32
    return %c0_i32, %c0_i32_0 : i32, i32
  }
  func.func @transform_2(%arg0: i32) -> (i32, i32) {
    %c0_i32 = arith.constant 0 : i32
    %c0_i32_0 = arith.constant 0 : i32
    %c0_i32_1 = arith.constant 0 : i32
    return %c0_i32, %c0_i32_0 : i32, i32
  }
  func.func @transform_3(%arg0: i32) -> (i32, i32) {
    %c0_i32 = arith.constant 0 : i32
    %c0_i32_0 = arith.constant 0 : i32
    %c0_i32_1 = arith.constant 0 : i32
    return %c0_i32, %c0_i32_0 : i32, i32
  }
  func.func @transform_4(%arg0: i32) -> (i32, i32) {
    %c0_i32 = arith.constant 0 : i32
    %c0_i32_0 = arith.constant 0 : i32
    %c0_i32_1 = arith.constant 0 : i32
    return %c0_i32, %c0_i32_0 : i32, i32
  }
  func.func @transform_5(%arg0: i32) -> (i32, i32) {
    %c0_i32 = arith.constant 0 : i32
    %c0_i32_0 = arith.constant 0 : i32
    %c0_i32_1 = arith.constant 0 : i32
    return %c0_i32, %c0_i32_0 : i32, i32
  }
  func.func @transform_6(%arg0: i32) -> (i32, i32) {
    %c0_i32 = arith.constant 0 : i32
    %c0_i32_0 = arith.constant 0 : i32
    %c0_i32_1 = arith.constant 0 : i32
    return %c0_i32, %c0_i32_0 : i32, i32
  }
  func.func @transform_7(%arg0: i32) -> (i32, i32) {
    %c0_i32 = arith.constant 0 : i32
    %c0_i32_0 = arith.constant 0 : i32
    return %c0_i32, %arg0 : i32, i32
  }
}

</mosaic_0001>

<llo_original>
// kernel: dnn_classifier_forward.1
$region0: #{dnn_classifier_forward.1}
  #allocation0 [shape = 'u32[]', space=smem, size = 0x4, offset = 0x4, fixed_abs, tag = 'smem constant byte address 0x4 - core index']
  #allocation1 [shape = 'u32[144,128]{1,0:T(1,128)}', space=vmem, size = 0x12000, scoped, tag = 'internal scratch']
  %s0 = inlined_call_operand.vmem [shape: bf16[32,128], index: 0, kind: input, shape index: {}]
  %s1 = inlined_call_operand.vmem [shape: bf16[64,32], index: 1, kind: input, shape index: {}]
  %s2 = inlined_call_operand.vmem [shape: f32[64,1], index: 2, kind: input, shape index: {}]
  %s3 = inlined_call_operand.vmem [shape: bf16[32,64], index: 3, kind: input, shape index: {}]
  %s4 = inlined_call_operand.vmem [shape: f32[32,1], index: 4, kind: input, shape index: {}]
  %s5 = inlined_call_operand.vmem [shape: bf16[8,32], index: 5, kind: input, shape index: {}]
  %s6 = inlined_call_operand.vmem [shape: f32[8,1], index: 6, kind: input, shape index: {}]
  %s7 = inlined_call_operand.vmem [shape: f32[8,128], index: 7, kind: output, shape index: {}]
  %s8 = sld [smem:[#allocation0]]
  $region38: #{dnn_classifier_forward.1} parent=0
    _
  %s10 = ssub.s32 1, %s8
  %s11 = scalar_select 0, %s10, %s8
  // Predicated region
  $region2: #{dnn_classifier_forward.1} parent=0 // pred_check
    _
  $region3: #{dnn_classifier_forward.1} parent=0 // pred_check_branch
    %13 = sbr.rel (0) target = $region5
  $region4: #{dnn_classifier_forward.1} parent=0 // pred_region
    _
  $region5: #{dnn_classifier_forward.1} parent=0 // pred_fallthru
    _
  // Predicated region
  $region6: #{dnn_classifier_forward.1} parent=0 // pred_check
    _
  $region7: #{dnn_classifier_forward.1} parent=0 // pred_check_branch
    %15 = sbr.rel (0) target = $region9
  $region8: #{dnn_classifier_forward.1} parent=0 // pred_region
    _
  $region9: #{dnn_classifier_forward.1} parent=0 // pred_fallthru
    _
  // Predicated region
  $region10: #{dnn_classifier_forward.1} parent=0 // pred_check
    _
  $region11: #{dnn_classifier_forward.1} parent=0 // pred_check_branch
    %17 = sbr.rel (0) target = $region13
  $region12: #{dnn_classifier_forward.1} parent=0 // pred_region
    _
  $region13: #{dnn_classifier_forward.1} parent=0 // pred_fallthru
    _
  // Predicated region
  $region14: #{dnn_classifier_forward.1} parent=0 // pred_check
    _
  $region15: #{dnn_classifier_forward.1} parent=0 // pred_check_branch
    %19 = sbr.rel (0) target = $region17
  $region16: #{dnn_classifier_forward.1} parent=0 // pred_region
    _
  $region17: #{dnn_classifier_forward.1} parent=0 // pred_fallthru
    _
  // Predicated region
  $region18: #{dnn_classifier_forward.1} parent=0 // pred_check
    _
  $region19: #{dnn_classifier_forward.1} parent=0 // pred_check_branch
    %21 = sbr.rel (0) target = $region21
  $region20: #{dnn_classifier_forward.1} parent=0 // pred_region
    _
  $region21: #{dnn_classifier_forward.1} parent=0 // pred_fallthru
    _
  // Predicated region
  $region22: #{dnn_classifier_forward.1} parent=0 // pred_check
    _
  $region23: #{dnn_classifier_forward.1} parent=0 // pred_check_branch
    %23 = sbr.rel (0) target = $region25
  $region24: #{dnn_classifier_forward.1} parent=0 // pred_region
    _
  $region25: #{dnn_classifier_forward.1} parent=0 // pred_fallthru
    _
  // Predicated region
  $region26: #{dnn_classifier_forward.1} parent=0 // pred_check
    _
  $region27: #{dnn_classifier_forward.1} parent=0 // pred_check_branch
    %25 = sbr.rel (0) target = $region29
  $region28: #{dnn_classifier_forward.1} parent=0 // pred_region
    _
  $region29: #{dnn_classifier_forward.1} parent=0 // pred_fallthru
    _
  %v27 = vld [vmem:[%s0] sm:$0xf]
  %v28 = vld [vmem:[%s0 + $0x4] sm:$0xf]
  %v29 = vld [vmem:[%s0 + $0x8] sm:$0xf]
  %v30 = vld [vmem:[%s0 + $0xc] sm:$0xf]
  %v31 = vld [vmem:[%s1] sm:$0xf]
  %v32 = vld [vmem:[%s1 + $0x4] sm:$0xf]
  %v33 = vld [vmem:[%s1 + $0x8] sm:$0xf]
  %v34 = vld [vmem:[%s1 + $0xc] sm:$0xf]
  %v35 = vld [vmem:[%s1 + $0x10] sm:$0xf]
  %v36 = vld [vmem:[%s1 + $0x14] sm:$0xf]
  %v37 = vld [vmem:[%s1 + $0x18] sm:$0xf]
  %v38 = vld [vmem:[%s1 + $0x1c] sm:$0xf]
  %v39 = vld [vmem:[%s2] sm:$0xff]
  %v40 = vld [vmem:[%s2 + $0x8] sm:$0xff]
  %v41 = vld [vmem:[%s2 + $0x10] sm:$0xff]
  %v42 = vld [vmem:[%s2 + $0x18] sm:$0xff]
  %v43 = vld [vmem:[%s2 + $0x20] sm:$0xff]
  %v44 = vld [vmem:[%s2 + $0x28] sm:$0xff]
  %v45 = vld [vmem:[%s2 + $0x30] sm:$0xff]
  %v46 = vld [vmem:[%s2 + $0x38] sm:$0xff]
  %48 = vset.pattern.permute.xlu0 0
  %49 = vperm.xlu0 %48, %v39
  %v50 = vpop.permute.xlu0 %49
  %53 = vset.pattern.permute.xlu0 0
  %54 = vperm.xlu0 %53, %v40
  %v55 = vpop.permute.xlu0 %54
  %58 = vset.pattern.permute.xlu0 0
  %59 = vperm.xlu0 %58, %v41
  %v60 = vpop.permute.xlu0 %59
  %63 = vset.pattern.permute.xlu0 0
  %64 = vperm.xlu0 %63, %v42
  %v65 = vpop.permute.xlu0 %64
  %68 = vset.pattern.permute.xlu0 0
  %69 = vperm.xlu0 %68, %v43
  %v70 = vpop.permute.xlu0 %69
  %73 = vset.pattern.permute.xlu0 0
  %74 = vperm.xlu0 %73, %v44
  %v75 = vpop.permute.xlu0 %74
  %78 = vset.pattern.permute.xlu0 0
  %79 = vperm.xlu0 %78, %v45
  %v80 = vpop.permute.xlu0 %79
  %83 = vset.pattern.permute.xlu0 0
  %84 = vperm.xlu0 %83, %v46
  %v85 = vpop.permute.xlu0 %84
  %v95 = vunpack.c.l.b16 %v31
  %v96 = vunpack.c.l.b16 %v32
  %v97 = vunpack.c.l.b16 %v33
  %v98 = vunpack.c.l.b16 %v34
  %v99 = vunpack.c.l.b16 %v35
  %v100 = vunpack.c.l.b16 %v36
  %v101 = vunpack.c.l.b16 %v37
  %v102 = vunpack.c.l.b16 %v38
  %v103 = vpack.c.b16 %v96, %v95
  %v104 = vpack.c.b16 %v98, %v97
  %v105 = vpack.c.b16 %v100, %v99
  %v106 = vpack.c.b16 %v102, %v101
  %v111 = vunpack.c.l.b16 %v27
  %v112 = vunpack.c.l.b16 %v28
  %v113 = vunpack.c.l.b16 %v29
  %v114 = vunpack.c.l.b16 %v30
  %v115 = vpack.c.b16 %v112, %v111
  %v116 = vpack.c.b16 %v114, %v113
  %vm119 = vcmask 261120
  %v121 = vsel %vm119, %v103, 0
  %v124 = vsel %vm119, %v104, 0
  %v127 = vsel %vm119, %v105, 0
  %v130 = vsel %vm119, %v106, 0
  %132 = vmatprep.subr.bf16.mxu0 0
  %133 = vmatpush1.bf16.msra.mxu0 %v115
  %134 = vmatprep.subr.bf16.mxu0 0
  %135 = vmatpush1.bf16.msra.mxu0 %v116
  %136 = vmatprep.subr.bf16.mxu0 0
  %137 = vmatpush1.bf16.msra.mxu0 0
  %138 = vmatprep.subr.bf16.mxu0 0
  %139 = vmatpush1.bf16.msra.mxu0 0
  %140 = vmatprep.subr.bf16.mxu0 0
  %141 = vmatpush1.bf16.msra.mxu0 0
  %142 = vmatprep.subr.bf16.mxu0 0
  %143 = vmatpush1.bf16.msra.mxu0 0
  %144 = vmatprep.subr.bf16.mxu0 0
  %145 = vmatpush1.bf16.msra.mxu0 0
  %146 = vmatprep.subr.bf16.mxu0 0
  %147 = vmatpush1.bf16.msra.mxu0 0
  %148 = vmatprep.subr.bf16.mxu0 0
  %149 = vmatpush1.bf16.msra.mxu0 0
  %150 = vmatprep.subr.bf16.mxu0 0
  %151 = vmatpush1.bf16.msra.mxu0 0
  %152 = vmatprep.subr.bf16.mxu0 0
  %153 = vmatpush1.bf16.msra.mxu0 0
  %154 = vmatprep.subr.bf16.mxu0 0
  %155 = vmatpush1.bf16.msra.mxu0 0
  %156 = vmatprep.subr.bf16.mxu0 0
  %157 = vmatpush1.bf16.msra.mxu0 0
  %158 = vmatprep.subr.bf16.mxu0 0
  %159 = vmatpush1.bf16.msra.mxu0 0
  %160 = vmatprep.subr.bf16.mxu0 0
  %161 = vmatpush1.bf16.msra.mxu0 0
  %162 = vmatprep.subr.bf16.mxu0 0
  %163 = vmatpush1.bf16.msra.mxu0 0
  %164 = vmatprep.mubr.bf16.mxu0 0
  %165 = vmatmul.mubr.bf16.gmra.mrb[0].mxu0 %v121
  %v166 = vpop.f32.mrb[0].mxu0
  %v167 = vadd.f32 %v50, %v166
  %v168 = vpop.f32.mrb[0].mxu0
  %v169 = vpop.f32.mrb[0].mxu0
  %v170 = vadd.f32 %v55, %v169
  %v171 = vpop.f32.mrb[0].mxu0
  %172 = vmatprep.mubr.bf16.mxu0 0
  %173 = vmatmul.mubr.bf16.gmra.mrb[0].mxu0 %v124
  %v174 = vpop.f32.mrb[0].mxu0
  %v175 = vadd.f32 %v60, %v174
  %v176 = vpop.f32.mrb[0].mxu0
  %v177 = vpop.f32.mrb[0].mxu0
  %v178 = vadd.f32 %v65, %v177
  %v179 = vpop.f32.mrb[0].mxu0
  %180 = vmatprep.mubr.bf16.mxu0 0
  %181 = vmatmul.mubr.bf16.gmra.mrb[0].mxu0 %v127
  %v182 = vpop.f32.mrb[0].mxu0
  %v183 = vadd.f32 %v70, %v182
  %v184 = vpop.f32.mrb[0].mxu0
  %v185 = vpop.f32.mrb[0].mxu0
  %v186 = vadd.f32 %v75, %v185
  %v187 = vpop.f32.mrb[0].mxu0
  %188 = vmatprep.mubr.bf16.mxu0 0
  %189 = vmatmul.mubr.bf16.gmra.mrb[0].mxu0 %v130
  %v190 = vpop.f32.mrb[0].mxu0
  %v191 = vadd.f32 %v80, %v190
  %v192 = vpop.f32.mrb[0].mxu0
  %v193 = vpop.f32.mrb[0].mxu0
  %v194 = vadd.f32 %v85, %v193
  %v195 = vpop.f32.mrb[0].mxu0
  %196 = vdwg.mxu0
  %vm197 = vcmp.ge.f32.partialorder %v167, 0.0
  %vm198 = vcmp.ge.f32.partialorder %v170, 0.0
  %vm199 = vcmp.ge.f32.partialorder %v175, 0.0
  %vm200 = vcmp.ge.f32.partialorder %v178, 0.0
  %vm201 = vcmp.ge.f32.partialorder %v183, 0.0
  %vm202 = vcmp.ge.f32.partialorder %v186, 0.0
  %vm203 = vcmp.ge.f32.partialorder %v191, 0.0
  %vm204 = vcmp.ge.f32.partialorder %v194, 0.0
  %v205 = vmul.f32 %v167, 0.22916667
  %v206 = vmul.f32 %v170, 0.22916667
  %v207 = vmul.f32 %v175, 0.22916667
  %v208 = vmul.f32 %v178, 0.22916667
  %v209 = vmul.f32 %v183, 0.22916667
  %v210 = vmul.f32 %v186, 0.22916667
  %v211 = vmul.f32 %v191, 0.22916667
  %v212 = vmul.f32 %v194, 0.22916667
  %v213 = vsel %vm197, %v167, %v205
  %v214 = vsel %vm198, %v170, %v206
  %v215 = vsel %vm199, %v175, %v207
  %v216 = vsel %vm200, %v178, %v208
  %v217 = vsel %vm201, %v183, %v209
  %v218 = vsel %vm202, %v186, %v210
  %v219 = vsel %vm203, %v191, %v211
  %v220 = vsel %vm204, %v194, %v212
  %v221 = vpack.c.bf16 %v214, %v213
  %v222 = vpack.c.bf16 %v216, %v215
  %v223 = vpack.c.bf16 %v218, %v217
  %v224 = vpack.c.bf16 %v220, %v219
  %v225 = vld [vmem:[%s3] sm:$0xf]
  %v226 = vld [vmem:[%s3 + $0x4] sm:$0xf]
  %v227 = vld [vmem:[%s3 + $0x8] sm:$0xf]
  %v228 = vld [vmem:[%s3 + $0xc] sm:$0xf]
  %v229 = vld [vmem:[%s4] sm:$0xff]
  %v230 = vld [vmem:[%s4 + $0x8] sm:$0xff]
  %v231 = vld [vmem:[%s4 + $0x10] sm:$0xff]
  %v232 = vld [vmem:[%s4 + $0x18] sm:$0xff]
  %234 = vset.pattern.permute.xlu0 0
  %235 = vperm.xlu0 %234, %v229
  %v236 = vpop.permute.xlu0 %235
  %239 = vset.pattern.permute.xlu0 0
  %240 = vperm.xlu0 %239, %v230
  %v241 = vpop.permute.xlu0 %240
  %244 = vset.pattern.permute.xlu0 0
  %245 = vperm.xlu0 %244, %v231
  %v246 = vpop.permute.xlu0 %245
  %249 = vset.pattern.permute.xlu0 0
  %250 = vperm.xlu0 %249, %v232
  %v251 = vpop.permute.xlu0 %250
  %v257 = vunpack.c.l.b16 %v225
  %v258 = vunpack.c.l.b16 %v226
  %v259 = vunpack.c.l.b16 %v227
  %v260 = vunpack.c.l.b16 %v228
  %v261 = vpack.c.b16 %v258, %v257
  %v262 = vpack.c.b16 %v260, %v259
  %vm263 = vcmask 523264
  %v265 = vsel %vm263, %v261, 0
  %v268 = vsel %vm263, %v262, 0
  %270 = vmatprep.subr.bf16.mxu0 0
  %271 = vmatpush1.bf16.msra.mxu0 %v221
  %272 = vmatprep.subr.bf16.mxu0 0
  %273 = vmatpush1.bf16.msra.mxu0 %v222
  %274 = vmatprep.subr.bf16.mxu0 0
  %275 = vmatpush1.bf16.msra.mxu0 %v223
  %276 = vmatprep.subr.bf16.mxu0 0
  %277 = vmatpush1.bf16.msra.mxu0 %v224
  %278 = vmatprep.subr.bf16.mxu0 0
  %279 = vmatpush1.bf16.msra.mxu0 0
  %280 = vmatprep.subr.bf16.mxu0 0
  %281 = vmatpush1.bf16.msra.mxu0 0
  %282 = vmatprep.subr.bf16.mxu0 0
  %283 = vmatpush1.bf16.msra.mxu0 0
  %284 = vmatprep.subr.bf16.mxu0 0
  %285 = vmatpush1.bf16.msra.mxu0 0
  %286 = vmatprep.subr.bf16.mxu0 0
  %287 = vmatpush1.bf16.msra.mxu0 0
  %288 = vmatprep.subr.bf16.mxu0 0
  %289 = vmatpush1.bf16.msra.mxu0 0
  %290 = vmatprep.subr.bf16.mxu0 0
  %291 = vmatpush1.bf16.msra.mxu0 0
  %292 = vmatprep.subr.bf16.mxu0 0
  %293 = vmatpush1.bf16.msra.mxu0 0
  %294 = vmatprep.subr.bf16.mxu0 0
  %295 = vmatpush1.bf16.msra.mxu0 0
  %296 = vmatprep.subr.bf16.mxu0 0
  %297 = vmatpush1.bf16.msra.mxu0 0
  %298 = vmatprep.subr.bf16.mxu0 0
  %299 = vmatpush1.bf16.msra.mxu0 0
  %300 = vmatprep.subr.bf16.mxu0 0
  %301 = vmatpush1.bf16.msra.mxu0 0
  %302 = vmatprep.mubr.bf16.mxu0 0
  %303 = vmatmul.mubr.bf16.gmra.mrb[0].mxu0 %v265
  %v304 = vpop.f32.mrb[0].mxu0
  %v305 = vadd.f32 %v236, %v304
  %v306 = vpop.f32.mrb[0].mxu0
  %v307 = vpop.f32.mrb[0].mxu0
  %v308 = vadd.f32 %v241, %v307
  %v309 = vpop.f32.mrb[0].mxu0
  %310 = vmatprep.mubr.bf16.mxu0 0
  %311 = vmatmul.mubr.bf16.gmra.mrb[0].mxu0 %v268
  %v312 = vpop.f32.mrb[0].mxu0
  %v313 = vadd.f32 %v246, %v312
  %v314 = vpop.f32.mrb[0].mxu0
  %v315 = vpop.f32.mrb[0].mxu0
  %v316 = vadd.f32 %v251, %v315
  %v317 = vpop.f32.mrb[0].mxu0
  %318 = vdwg.mxu0
  %vm319 = vcmp.ge.f32.partialorder %v305, 0.0
  %vm320 = vcmp.ge.f32.partialorder %v308, 0.0
  %vm321 = vcmp.ge.f32.partialorder %v313, 0.0
  %vm322 = vcmp.ge.f32.partialorder %v316, 0.0
  %v323 = vmul.f32 %v305, 0.22916667
  %v324 = vmul.f32 %v308, 0.22916667
  %v325 = vmul.f32 %v313, 0.22916667
  %v326 = vmul.f32 %v316, 0.22916667
  %v327 = vsel %vm319, %v305, %v323
  %v328 = vsel %vm320, %v308, %v324
  %v329 = vsel %vm321, %v313, %v325
  %v330 = vsel %vm322, %v316, %v326
  %v331 = vpack.c.bf16 %v328, %v327
  %v332 = vpack.c.bf16 %v330, %v329
  %v333 = vld [vmem:[%s5] sm:$0xf]
  %v334 = vld [vmem:[%s6] sm:$0xff]
  %336 = vset.pattern.permute.xlu0 0
  %337 = vperm.xlu0 %336, %v334
  %v338 = vpop.permute.xlu0 %337
  %v341 = vsel %vm119, %v333, 0
  %343 = vmatprep.subr.bf16.mxu0 0
  %344 = vmatpush1.bf16.msra.mxu0 %v331
  %345 = vmatprep.subr.bf16.mxu0 0
  %346 = vmatpush1.bf16.msra.mxu0 %v332
  %347 = vmatprep.subr.bf16.mxu0 0
  %348 = vmatpush1.bf16.msra.mxu0 0
  %349 = vmatprep.subr.bf16.mxu0 0
  %350 = vmatpush1.bf16.msra.mxu0 0
  %351 = vmatprep.subr.bf16.mxu0 0
  %352 = vmatpush1.bf16.msra.mxu0 0
  %353 = vmatprep.subr.bf16.mxu0 0
  %354 = vmatpush1.bf16.msra.mxu0 0
  %355 = vmatprep.subr.bf16.mxu0 0
  %356 = vmatpush1.bf16.msra.mxu0 0
  %357 = vmatprep.subr.bf16.mxu0 0
  %358 = vmatpush1.bf16.msra.mxu0 0
  %359 = vmatprep.subr.bf16.mxu0 0
  %360 = vmatpush1.bf16.msra.mxu0 0
  %361 = vmatprep.subr.bf16.mxu0 0
  %362 = vmatpush1.bf16.msra.mxu0 0
  %363 = vmatprep.subr.bf16.mxu0 0
  %364 = vmatpush1.bf16.msra.mxu0 0
  %365 = vmatprep.subr.bf16.mxu0 0
  %366 = vmatpush1.bf16.msra.mxu0 0
  %367 = vmatprep.subr.bf16.mxu0 0
  %368 = vmatpush1.bf16.msra.mxu0 0
  %369 = vmatprep.subr.bf16.mxu0 0
  %370 = vmatpush1.bf16.msra.mxu0 0
  %371 = vmatprep.subr.bf16.mxu0 0
  %372 = vmatpush1.bf16.msra.mxu0 0
  %373 = vmatprep.subr.bf16.mxu0 0
  %374 = vmatpush1.bf16.msra.mxu0 0
  %375 = vmatprep.mubr.bf16.mxu0 0
  %376 = vmatmul.mubr.bf16.gmra.mrb[0].mxu0 %v341
  %v377 = vpop.f32.mrb[0].mxu0
  %v378 = vadd.f32 %v338, %v377
  %v379 = vpop.f32.mrb[0].mxu0
  %v380 = vpop.f32.mrb[0].mxu0
  %v381 = vpop.f32.mrb[0].mxu0
  %382 = vdwg.mxu0
  %v383 = vsub.f32 0.0, %v378
  %v384 = vmul.f32 %v383, 1.442695
  %v385 = vpow.pop %v384
  %v386 = vadd.f32 %v385, 1.0
  %v387 = vrcp.pop %v386
  %v388 = vmul.f32 1.0, %v387
  %389 = vst [vmem:[%s7] sm:$0xff] %v388
  // Predicated region
  $region30: #{dnn_classifier_forward.1} parent=0 // pred_check
    _
  $region31: #{dnn_classifier_forward.1} parent=0 // pred_check_branch
    %391 = sbr.rel (0) target = $region33
  $region32: #{dnn_classifier_forward.1} parent=0 // pred_region
    _
  $region33: #{dnn_classifier_forward.1} parent=0 // pred_fallthru
    _
  // Predicated region
  $region34: #{dnn_classifier_forward.1} parent=0 // pred_check
    _
  $region35: #{dnn_classifier_forward.1} parent=0 // pred_check_branch
    %393 = sbr.rel (0) target = $region37
  $region36: #{dnn_classifier_forward.1} parent=0 // pred_region
    _
  $region37: #{dnn_classifier_forward.1} parent=0 // pred_fallthru
    _

</llo_original>
